<compile_context>
chip_gen: v5e
topology: v5e:2x2
jax: 0.10.0
libtpu: 0.0.40
codegen_flags: <defaults>
</compile_context>

<pallas_src>
import jax
import jax.numpy as jnp
from jax.experimental import pallas as pl
from jax.experimental.pallas import tpu as pltpu

_LANE = 128     # vreg lane width
_SUBLANE = 8    # f32 sublane count


def _round_up(n, m):
    return ((n + m - 1) // m) * m


def linear_block_kernel(x_ref, w1_ref, b1_ref, w2_ref, b2_ref, w3_ref, b3_ref, o_ref):
    """Fused MLP hot path. x/w are bf16 (MXU-native), accumulation + bias add in f32."""
    x = x_ref[...]                                                      # (TB, Dp) bf16

    h1 = jnp.dot(x, w1_ref[...], preferred_element_type=jnp.float32) + b1_ref[...]
    h1 = jnp.maximum(h1, 0.0).astype(jnp.bfloat16)

    h2 = jnp.dot(h1, w2_ref[...], preferred_element_type=jnp.float32) + b2_ref[...]
    h2 = jnp.maximum(h2, 0.0).astype(jnp.bfloat16)

    out = jnp.dot(h2, w3_ref[...], preferred_element_type=jnp.float32) + b3_ref[...]
    o_ref[...] = out.astype(o_ref.dtype)                                # (TB, Cp) lane-dense


@jax.jit
def linear_block(x, params):
    """Forward pass of LinearBlock.

    x: (B, in_channels) float32
    params: dict w1,b1,w2,b2,w3,b3 with w_i stored (in, out) (transposed vs. PyTorch).
    """
    w1, b1 = params["w1"], params["b1"]
    w2, b2 = params["w2"], params["b2"]
    w3, b3 = params["w3"], params["b3"]
    B, D = x.shape
    C = w3.shape[1]

    # Lane-dense padding: feature / class dims to multiples of 128.
    Dp = _round_up(D, _LANE)
    Cp = _round_up(C, _LANE)

    # Batch tile: as large as reasonable (<= 256 rows), multiple of 8 sublanes.
    tile_b = min(256, _round_up(B, _SUBLANE))
    Bp = _round_up(B, tile_b)

    def pad2(a, rows, cols):
        return jnp.pad(a, ((0, rows - a.shape[0]), (0, cols - a.shape[1])))

    # Zero padding keeps the math on the original (B, C) sub-block exact.
    x_p = pad2(x, Bp, Dp).astype(jnp.bfloat16)
    w1_p = pad2(w1, Dp, Dp).astype(jnp.bfloat16)
    w2_p = pad2(w2, Dp, Dp).astype(jnp.bfloat16)
    w3_p = pad2(w3, Dp, Cp).astype(jnp.bfloat16)
    b1_p = pad2(b1, 1, Dp)   # biases stay f32: added to the f32 accumulator
    b2_p = pad2(b2, 1, Dp)
    b3_p = pad2(b3, 1, Cp)

    grid = (Bp // tile_b,)

    # Weights/biases resident across the batch grid (constant block index).
    resident = lambda shape: pl.BlockSpec(shape, lambda i: (0, 0))

    out_p = pl.pallas_call(
        linear_block_kernel,
        out_shape=jax.ShapeDtypeStruct((Bp, Cp), x.dtype),
        grid=grid,
        in_specs=[
            pl.BlockSpec((tile_b, Dp), lambda i: (i, 0)),   # x: tiled along batch
            resident(w1_p.shape), resident(b1_p.shape),
            resident(w2_p.shape), resident(b2_p.shape),
            resident(w3_p.shape), resident(b3_p.shape),
        ],
        out_specs=pl.BlockSpec((tile_b, Cp), lambda i: (i, 0)),
        compiler_params=pltpu.CompilerParams(
            dimension_semantics=("parallel",),      # lets v7x use both TensorCores
            vmem_limit_bytes=64 * 1024 * 1024,      # above v5e's 16 MiB scoped default
        ),
    )(x_p, w1_p, b1_p, w2_p, b2_p, w3_p, b3_p)

    return out_p[:B, :C]


def init_params(key, in_channels, num_classes):
    """Deterministic init matching nn.Linear shapes (weights stored transposed)."""
    ks = jax.random.split(key, 6)

    def lin(kw, kb, fan_in, fan_out):
        bound = 1.0 / jnp.sqrt(fan_in)
        # PyTorch weight is (out, in); we store (in, out) for x @ W.
        w = jax.random.uniform(kw, (fan_in, fan_out), jnp.float32, -bound, bound)
        b = jax.random.uniform(kb, (1, fan_out), jnp.float32, -bound, bound)
        return w, b

    w1, b1 = lin(ks[0], ks[1], in_channels, in_channels)
    w2, b2 = lin(ks[2], ks[3], in_channels, in_channels)
    w3, b3 = lin(ks[4], ks[5], in_channels, num_classes)
    return dict(w1=w1, b1=b1, w2=w2, b2=b2, w3=w3, b3=b3)


if __name__ == "__main__":
    key = jax.random.PRNGKey(0)
    k_x, k_p = jax.random.split(key)

    B, in_channels, num_classes = 8, 32, 16
    x = jax.random.normal(k_x, (B, in_channels), jnp.float32)
    params = init_params(k_p, in_channels, num_classes)

    out = linear_block(x, params)
    jax.block_until_ready(out)

    # Pure-f32 reference (same semantics as the PyTorch module). Kernel uses bf16
    # MXU operands with f32 accumulation, so tolerances are relaxed accordingly.
    h = jnp.maximum(x @ params["w1"] + params["b1"], 0.0)
    h = jnp.maximum(h @ params["w2"] + params["b2"], 0.0)
    ref = h @ params["w3"] + params["b3"]

    assert out.shape == (B, num_classes)
    assert jnp.allclose(out, ref, atol=5e-2, rtol=5e-2), float(jnp.max(jnp.abs(out - ref)))

    print("KERNEL_OK")
</pallas_src>

<mosaic_0001>
module attributes {stable_mosaic.version = 11 : i64} {
  func.func @linear_block_kernel(%arg0: i32, %arg1: memref<8x128xbf16, #tpu.memory_space<vmem>>, %arg2: memref<128x128xbf16, #tpu.memory_space<vmem>>, %arg3: memref<1x128xf32, #tpu.memory_space<vmem>>, %arg4: memref<128x128xbf16, #tpu.memory_space<vmem>>, %arg5: memref<1x128xf32, #tpu.memory_space<vmem>>, %arg6: memref<128x128xbf16, #tpu.memory_space<vmem>>, %arg7: memref<1x128xf32, #tpu.memory_space<vmem>>, %arg8: memref<8x128xf32, #tpu.memory_space<vmem>>) attributes {dimension_semantics = [#tpu.dimension_semantics<parallel>], iteration_bounds = array<i64: 1>, scalar_prefetch = 0 : i64, scratch_operands = 0 : i64, tpu.core_type = #tpu.core_type<tc>, window_params = [{transform_indices = @transform_0, window_bounds = array<i64: 8, 128>}, {pipeline_mode = #tpu.pipeline_mode<synchronous>, transform_indices = @transform_1, window_bounds = array<i64: 128, 128>}, {pipeline_mode = #tpu.pipeline_mode<synchronous>, transform_indices = @transform_2, window_bounds = array<i64: 1, 128>}, {pipeline_mode = #tpu.pipeline_mode<synchronous>, transform_indices = @transform_3, window_bounds = array<i64: 128, 128>}, {pipeline_mode = #tpu.pipeline_mode<synchronous>, transform_indices = @transform_4, window_bounds = array<i64: 1, 128>}, {pipeline_mode = #tpu.pipeline_mode<synchronous>, transform_indices = @transform_5, window_bounds = array<i64: 128, 128>}, {pipeline_mode = #tpu.pipeline_mode<synchronous>, transform_indices = @transform_6, window_bounds = array<i64: 1, 128>}, {transform_indices = @transform_7, window_bounds = array<i64: 8, 128>}]} {
    %c0 = arith.constant 0 : index
    %c0_0 = arith.constant 0 : index
    %0 = vector.load %arg1[%c0, %c0_0] : memref<8x128xbf16, #tpu.memory_space<vmem>>, vector<8x128xbf16>
    %c0_1 = arith.constant 0 : index
    %c0_2 = arith.constant 0 : index
    %1 = vector.load %arg2[%c0_1, %c0_2] : memref<128x128xbf16, #tpu.memory_space<vmem>>, vector<128x128xbf16>
    %cst = arith.constant dense<0.000000e+00> : vector<8x128xf32>
    %2 = tpu.matmul %0, %1, %cst {dimension_numbers = #tpu.dot_dimension_numbers<[1], [0], [0], [1], [0, 0, 1, 1], [], []>} : vector<8x128xbf16>, vector<128x128xbf16>, vector<8x128xf32> -> vector<8x128xf32>
    %c0_3 = arith.constant 0 : index
    %c0_4 = arith.constant 0 : index
    %3 = vector.load %arg3[%c0_3, %c0_4] : memref<1x128xf32, #tpu.memory_space<vmem>>, vector<1x128xf32>
    %4 = vector.broadcast %3 : vector<1x128xf32> to vector<8x128xf32>
    %5 = arith.addf %2, %4 : vector<8x128xf32>
    %cst_5 = arith.constant 0.000000e+00 : f32
    %6 = vector.broadcast %cst_5 : f32 to vector<8x128xf32>
    %7 = arith.maximumf %5, %6 : vector<8x128xf32>
    %8 = arith.truncf %7 : vector<8x128xf32> to vector<8x128xbf16>
    %c0_6 = arith.constant 0 : index
    %c0_7 = arith.constant 0 : index
    %9 = vector.load %arg4[%c0_6, %c0_7] : memref<128x128xbf16, #tpu.memory_space<vmem>>, vector<128x128xbf16>
    %cst_8 = arith.constant dense<0.000000e+00> : vector<8x128xf32>
    %10 = tpu.matmul %8, %9, %cst_8 {dimension_numbers = #tpu.dot_dimension_numbers<[1], [0], [0], [1], [0, 0, 1, 1], [], []>} : vector<8x128xbf16>, vector<128x128xbf16>, vector<8x128xf32> -> vector<8x128xf32>
    %c0_9 = arith.constant 0 : index
    %c0_10 = arith.constant 0 : index
    %11 = vector.load %arg5[%c0_9, %c0_10] : memref<1x128xf32, #tpu.memory_space<vmem>>, vector<1x128xf32>
    %12 = vector.broadcast %11 : vector<1x128xf32> to vector<8x128xf32>
    %13 = arith.addf %10, %12 : vector<8x128xf32>
    %cst_11 = arith.constant 0.000000e+00 : f32
    %14 = vector.broadcast %cst_11 : f32 to vector<8x128xf32>
    %15 = arith.maximumf %13, %14 : vector<8x128xf32>
    %16 = arith.truncf %15 : vector<8x128xf32> to vector<8x128xbf16>
    %c0_12 = arith.constant 0 : index
    %c0_13 = arith.constant 0 : index
    %17 = vector.load %arg6[%c0_12, %c0_13] : memref<128x128xbf16, #tpu.memory_space<vmem>>, vector<128x128xbf16>
    %cst_14 = arith.constant dense<0.000000e+00> : vector<8x128xf32>
    %18 = tpu.matmul %16, %17, %cst_14 {dimension_numbers = #tpu.dot_dimension_numbers<[1], [0], [0], [1], [0, 0, 1, 1], [], []>} : vector<8x128xbf16>, vector<128x128xbf16>, vector<8x128xf32> -> vector<8x128xf32>
    %c0_15 = arith.constant 0 : index
    %c0_16 = arith.constant 0 : index
    %19 = vector.load %arg7[%c0_15, %c0_16] : memref<1x128xf32, #tpu.memory_space<vmem>>, vector<1x128xf32>
    %20 = vector.broadcast %19 : vector<1x128xf32> to vector<8x128xf32>
    %21 = arith.addf %18, %20 : vector<8x128xf32>
    %c0_17 = arith.constant 0 : index
    %c0_18 = arith.constant 0 : index
    %22 = vector.load %arg8[%c0_17, %c0_18] : memref<8x128xf32, #tpu.memory_space<vmem>>, vector<8x128xf32>
    tpu.vector_store %arg8[%c0_17, %c0_18], %21 {strides = array<i32>} : memref<8x128xf32, #tpu.memory_space<vmem>>, vector<8x128xf32>,
    return
  }
  func.func @transform_0(%arg0: i32) -> (i32, i32) {
    %c0_i32 = arith.constant 0 : i32
    %c0_i32_0 = arith.constant 0 : i32
    return %arg0, %c0_i32 : i32, i32
  }
  func.func @transform_1(%arg0: i32) -> (i32, i32) {
    %c0_i32 = arith.constant 0 : i32
    %c0_i32_0 = arith.constant 0 : i32
    %c0_i32_1 = arith.constant 0 : i32
    return %c0_i32, %c0_i32_0 : i32, i32
  }
  func.func @transform_2(%arg0: i32) -> (i32, i32) {
    %c0_i32 = arith.constant 0 : i32
    %c0_i32_0 = arith.constant 0 : i32
    %c0_i32_1 = arith.constant 0 : i32
    return %c0_i32, %c0_i32_0 : i32, i32
  }
  func.func @transform_3(%arg0: i32) -> (i32, i32) {
    %c0_i32 = arith.constant 0 : i32
    %c0_i32_0 = arith.constant 0 : i32
    %c0_i32_1 = arith.constant 0 : i32
    return %c0_i32, %c0_i32_0 : i32, i32
  }
  func.func @transform_4(%arg0: i32) -> (i32, i32) {
    %c0_i32 = arith.constant 0 : i32
    %c0_i32_0 = arith.constant 0 : i32
    %c0_i32_1 = arith.constant 0 : i32
    return %c0_i32, %c0_i32_0 : i32, i32
  }
  func.func @transform_5(%arg0: i32) -> (i32, i32) {
    %c0_i32 = arith.constant 0 : i32
    %c0_i32_0 = arith.constant 0 : i32
    %c0_i32_1 = arith.constant 0 : i32
    return %c0_i32, %c0_i32_0 : i32, i32
  }
  func.func @transform_6(%arg0: i32) -> (i32, i32) {
    %c0_i32 = arith.constant 0 : i32
    %c0_i32_0 = arith.constant 0 : i32
    %c0_i32_1 = arith.constant 0 : i32
    return %c0_i32, %c0_i32_0 : i32, i32
  }
  func.func @transform_7(%arg0: i32) -> (i32, i32) {
    %c0_i32 = arith.constant 0 : i32
    %c0_i32_0 = arith.constant 0 : i32
    return %arg0, %c0_i32 : i32, i32
  }
}

</mosaic_0001>

<llo_original>
// kernel: linear_block.1
$region0: #{linear_block.1}
  #allocation0 [shape = 'u32[]', space=smem, size = 0x4, offset = 0x4, fixed_abs, tag = 'smem constant byte address 0x4 - core index']
  #allocation1 [shape = 'u32[72,128]{1,0:T(1,128)}', space=vmem, size = 0x9000, scoped, tag = 'internal scratch']
  %s0 = inlined_call_operand.vmem [shape: bf16[8,128], index: 0, kind: input, shape index: {}]
  %s1 = inlined_call_operand.vmem [shape: bf16[128,128], index: 1, kind: input, shape index: {}]
  %s2 = inlined_call_operand.vmem [shape: f32[1,128], index: 2, kind: input, shape index: {}]
  %s3 = inlined_call_operand.vmem [shape: bf16[128,128], index: 3, kind: input, shape index: {}]
  %s4 = inlined_call_operand.vmem [shape: f32[1,128], index: 4, kind: input, shape index: {}]
  %s5 = inlined_call_operand.vmem [shape: bf16[128,128], index: 5, kind: input, shape index: {}]
  %s6 = inlined_call_operand.vmem [shape: f32[1,128], index: 6, kind: input, shape index: {}]
  %s7 = inlined_call_operand.hbm [shape: f32[8,128], index: 7, kind: output, shape index: {}]
  %s8 = sld [smem:[#allocation0]]
  $region38: #{linear_block.1} parent=0
    _
  %s10 = ssub.s32 1, %s8
  %s11 = scalar_select 0, %s10, %s8
  $region1: #{linear_block.1} parent=0
    #allocation2 [shape = 'u8[4096]{0}', space=vmem, size = 0x1000, scoped, tag = 'output window, operand 0, single buffered']
    #allocation3 [shape = 's32[1]{0}', space=sflag, size = 0x4, scoped, tag = 'scoped memory for linear_block.1']
    %12 = vsyncpa [#allocation3], 0
    // Predicated region
    $region2: #{linear_block.1} parent=1 // pred_check
      _
    $region3: #{linear_block.1} parent=1 // pred_check_branch
      %14 = sbr.rel (0) target = $region5
    $region4: #{linear_block.1} parent=1 // pred_region
      _
    $region5: #{linear_block.1} parent=1 // pred_fallthru
      _
    // Predicated region
    $region6: #{linear_block.1} parent=1 // pred_check
      _
    $region7: #{linear_block.1} parent=1 // pred_check_branch
      %16 = sbr.rel (0) target = $region9
    $region8: #{linear_block.1} parent=1 // pred_region
      _
    $region9: #{linear_block.1} parent=1 // pred_fallthru
      _
    // Predicated region
    $region10: #{linear_block.1} parent=1 // pred_check
      _
    $region11: #{linear_block.1} parent=1 // pred_check_branch
      %18 = sbr.rel (0) target = $region13
    $region12: #{linear_block.1} parent=1 // pred_region
      _
    $region13: #{linear_block.1} parent=1 // pred_fallthru
      _
    // Predicated region
    $region14: #{linear_block.1} parent=1 // pred_check
      _
    $region15: #{linear_block.1} parent=1 // pred_check_branch
      %20 = sbr.rel (0) target = $region17
    $region16: #{linear_block.1} parent=1 // pred_region
      _
    $region17: #{linear_block.1} parent=1 // pred_fallthru
      _
    // Predicated region
    $region18: #{linear_block.1} parent=1 // pred_check
      _
    $region19: #{linear_block.1} parent=1 // pred_check_branch
      %22 = sbr.rel (0) target = $region21
    $region20: #{linear_block.1} parent=1 // pred_region
      _
    $region21: #{linear_block.1} parent=1 // pred_fallthru
      _
    // Predicated region
    $region22: #{linear_block.1} parent=1 // pred_check
      _
    $region23: #{linear_block.1} parent=1 // pred_check_branch
      %24 = sbr.rel (0) target = $region25
    $region24: #{linear_block.1} parent=1 // pred_region
      _
    $region25: #{linear_block.1} parent=1 // pred_fallthru
      _
    // Predicated region
    $region26: #{linear_block.1} parent=1 // pred_check
      _
    $region27: #{linear_block.1} parent=1 // pred_check_branch
      %26 = sbr.rel (0) target = $region29
    $region28: #{linear_block.1} parent=1 // pred_region
      _
    $region29: #{linear_block.1} parent=1 // pred_fallthru
      _
    %v27 = vld [vmem:[%s0] sm:$0xf]
    %v28 = vld [vmem:[%s1] sm:$0xf]
    %v29 = vld [vmem:[%s1 + $0x4] sm:$0xf]
    %v30 = vld [vmem:[%s1 + $0x8] sm:$0xf]
    %v31 = vld [vmem:[%s1 + $0xc] sm:$0xf]
    %v32 = vld [vmem:[%s1 + $0x10] sm:$0xf]
    %v33 = vld [vmem:[%s1 + $0x14] sm:$0xf]
    %v34 = vld [vmem:[%s1 + $0x18] sm:$0xf]
    %v35 = vld [vmem:[%s1 + $0x1c] sm:$0xf]
    %v36 = vld [vmem:[%s1 + $0x20] sm:$0xf]
    %v37 = vld [vmem:[%s1 + $0x24] sm:$0xf]
    %v38 = vld [vmem:[%s1 + $0x28] sm:$0xf]
    %v39 = vld [vmem:[%s1 + $0x2c] sm:$0xf]
    %v40 = vld [vmem:[%s1 + $0x30] sm:$0xf]
    %v41 = vld [vmem:[%s1 + $0x34] sm:$0xf]
    %v42 = vld [vmem:[%s1 + $0x38] sm:$0xf]
    %v43 = vld [vmem:[%s1 + $0x3c] sm:$0xf]
    %v44 = vld [vmem:[%s2] sm:$0x1]
    %v46 = vperm.slane %v44, 0
    %v64 = vunpack.c.l.b16 %v28
    %v65 = vunpack.c.l.b16 %v29
    %v66 = vunpack.c.l.b16 %v30
    %v67 = vunpack.c.l.b16 %v31
    %v68 = vunpack.c.l.b16 %v32
    %v69 = vunpack.c.l.b16 %v33
    %v70 = vunpack.c.l.b16 %v34
    %v71 = vunpack.c.l.b16 %v35
    %v72 = vunpack.c.l.b16 %v36
    %v73 = vunpack.c.l.b16 %v37
    %v74 = vunpack.c.l.b16 %v38
    %v75 = vunpack.c.l.b16 %v39
    %v76 = vunpack.c.l.b16 %v40
    %v77 = vunpack.c.l.b16 %v41
    %v78 = vunpack.c.l.b16 %v42
    %v79 = vunpack.c.l.b16 %v43
    %v80 = vpack.c.b16 %v65, %v64
    %v81 = vpack.c.b16 %v67, %v66
    %v82 = vpack.c.b16 %v69, %v68
    %v83 = vpack.c.b16 %v71, %v70
    %v84 = vpack.c.b16 %v73, %v72
    %v85 = vpack.c.b16 %v75, %v74
    %v86 = vpack.c.b16 %v77, %v76
    %v87 = vpack.c.b16 %v79, %v78
    %96 = vmatpush.bf16.msra.mxu0 %v87
    %97 = vmatpush.bf16.msra.mxu0 %v86
    %98 = vmatpush.bf16.msra.mxu0 %v85
    %99 = vmatpush.bf16.msra.mxu0 %v84
    %100 = vmatpush.bf16.msra.mxu0 %v83
    %101 = vmatpush.bf16.msra.mxu0 %v82
    %102 = vmatpush.bf16.msra.mxu0 %v81
    %103 = vmatpush.bf16.msra.mxu0 %v80
    %104 = vmatmul.bf16.gmra.mxu0 %v27
    %v105 = vpop.f32.mrf.mxu0
    %v106 = vadd.f32 %v46, %v105
    %v107 = vpop.f32.mrf.mxu0
    %108 = vdwg.mxu0
    %v109 = vmax.f32 %v106, 0.0
    %v110 = vpack.c.bf16 %v109, %v109
    %v111 = vld [vmem:[%s3] sm:$0xf]
    %v112 = vld [vmem:[%s3 + $0x4] sm:$0xf]
    %v113 = vld [vmem:[%s3 + $0x8] sm:$0xf]
    %v114 = vld [vmem:[%s3 + $0xc] sm:$0xf]
    %v115 = vld [vmem:[%s3 + $0x10] sm:$0xf]
    %v116 = vld [vmem:[%s3 + $0x14] sm:$0xf]
    %v117 = vld [vmem:[%s3 + $0x18] sm:$0xf]
    %v118 = vld [vmem:[%s3 + $0x1c] sm:$0xf]
    %v119 = vld [vmem:[%s3 + $0x20] sm:$0xf]
    %v120 = vld [vmem:[%s3 + $0x24] sm:$0xf]
    %v121 = vld [vmem:[%s3 + $0x28] sm:$0xf]
    %v122 = vld [vmem:[%s3 + $0x2c] sm:$0xf]
    %v123 = vld [vmem:[%s3 + $0x30] sm:$0xf]
    %v124 = vld [vmem:[%s3 + $0x34] sm:$0xf]
    %v125 = vld [vmem:[%s3 + $0x38] sm:$0xf]
    %v126 = vld [vmem:[%s3 + $0x3c] sm:$0xf]
    %v127 = vld [vmem:[%s4] sm:$0x1]
    %v129 = vperm.slane %v127, 0
    %v147 = vunpack.c.l.b16 %v111
    %v148 = vunpack.c.l.b16 %v112
    %v149 = vunpack.c.l.b16 %v113
    %v150 = vunpack.c.l.b16 %v114
    %v151 = vunpack.c.l.b16 %v115
    %v152 = vunpack.c.l.b16 %v116
    %v153 = vunpack.c.l.b16 %v117
    %v154 = vunpack.c.l.b16 %v118
    %v155 = vunpack.c.l.b16 %v119
    %v156 = vunpack.c.l.b16 %v120
    %v157 = vunpack.c.l.b16 %v121
    %v158 = vunpack.c.l.b16 %v122
    %v159 = vunpack.c.l.b16 %v123
    %v160 = vunpack.c.l.b16 %v124
    %v161 = vunpack.c.l.b16 %v125
    %v162 = vunpack.c.l.b16 %v126
    %v163 = vpack.c.b16 %v148, %v147
    %v164 = vpack.c.b16 %v150, %v149
    %v165 = vpack.c.b16 %v152, %v151
    %v166 = vpack.c.b16 %v154, %v153
    %v167 = vpack.c.b16 %v156, %v155
    %v168 = vpack.c.b16 %v158, %v157
    %v169 = vpack.c.b16 %v160, %v159
    %v170 = vpack.c.b16 %v162, %v161
    %179 = vmatpush.bf16.msra.mxu0 %v170
    %180 = vmatpush.bf16.msra.mxu0 %v169
    %181 = vmatpush.bf16.msra.mxu0 %v168
    %182 = vmatpush.bf16.msra.mxu0 %v167
    %183 = vmatpush.bf16.msra.mxu0 %v166
    %184 = vmatpush.bf16.msra.mxu0 %v165
    %185 = vmatpush.bf16.msra.mxu0 %v164
    %186 = vmatpush.bf16.msra.mxu0 %v163
    %187 = vmatmul.bf16.gmra.mxu0 %v110
    %v188 = vpop.f32.mrf.mxu0
    %v189 = vadd.f32 %v129, %v188
    %v190 = vpop.f32.mrf.mxu0
    %191 = vdwg.mxu0
    %v192 = vmax.f32 %v189, 0.0
    %v193 = vpack.c.bf16 %v192, %v192
    %v194 = vld [vmem:[%s5] sm:$0xf]
    %v195 = vld [vmem:[%s5 + $0x4] sm:$0xf]
    %v196 = vld [vmem:[%s5 + $0x8] sm:$0xf]
    %v197 = vld [vmem:[%s5 + $0xc] sm:$0xf]
    %v198 = vld [vmem:[%s5 + $0x10] sm:$0xf]
    %v199 = vld [vmem:[%s5 + $0x14] sm:$0xf]
    %v200 = vld [vmem:[%s5 + $0x18] sm:$0xf]
    %v201 = vld [vmem:[%s5 + $0x1c] sm:$0xf]
    %v202 = vld [vmem:[%s5 + $0x20] sm:$0xf]
    %v203 = vld [vmem:[%s5 + $0x24] sm:$0xf]
    %v204 = vld [vmem:[%s5 + $0x28] sm:$0xf]
    %v205 = vld [vmem:[%s5 + $0x2c] sm:$0xf]
    %v206 = vld [vmem:[%s5 + $0x30] sm:$0xf]
    %v207 = vld [vmem:[%s5 + $0x34] sm:$0xf]
    %v208 = vld [vmem:[%s5 + $0x38] sm:$0xf]
    %v209 = vld [vmem:[%s5 + $0x3c] sm:$0xf]
    %v210 = vld [vmem:[%s6] sm:$0x1]
    %v212 = vperm.slane %v210, 0
    %v230 = vunpack.c.l.b16 %v194
    %v231 = vunpack.c.l.b16 %v195
    %v232 = vunpack.c.l.b16 %v196
    %v233 = vunpack.c.l.b16 %v197
    %v234 = vunpack.c.l.b16 %v198
    %v235 = vunpack.c.l.b16 %v199
    %v236 = vunpack.c.l.b16 %v200
    %v237 = vunpack.c.l.b16 %v201
    %v238 = vunpack.c.l.b16 %v202
    %v239 = vunpack.c.l.b16 %v203
    %v240 = vunpack.c.l.b16 %v204
    %v241 = vunpack.c.l.b16 %v205
    %v242 = vunpack.c.l.b16 %v206
    %v243 = vunpack.c.l.b16 %v207
    %v244 = vunpack.c.l.b16 %v208
    %v245 = vunpack.c.l.b16 %v209
    %v246 = vpack.c.b16 %v231, %v230
    %v247 = vpack.c.b16 %v233, %v232
    %v248 = vpack.c.b16 %v235, %v234
    %v249 = vpack.c.b16 %v237, %v236
    %v250 = vpack.c.b16 %v239, %v238
    %v251 = vpack.c.b16 %v241, %v240
    %v252 = vpack.c.b16 %v243, %v242
    %v253 = vpack.c.b16 %v245, %v244
    %262 = vmatpush.bf16.msra.mxu0 %v253
    %263 = vmatpush.bf16.msra.mxu0 %v252
    %264 = vmatpush.bf16.msra.mxu0 %v251
    %265 = vmatpush.bf16.msra.mxu0 %v250
    %266 = vmatpush.bf16.msra.mxu0 %v249
    %267 = vmatpush.bf16.msra.mxu0 %v248
    %268 = vmatpush.bf16.msra.mxu0 %v247
    %269 = vmatpush.bf16.msra.mxu0 %v246
    %270 = vmatmul.bf16.gmra.mxu0 %v193
    %v271 = vpop.f32.mrf.mxu0
    %v272 = vadd.f32 %v212, %v271
    %v273 = vpop.f32.mrf.mxu0
    %274 = vdwg.mxu0
    %275 = vst [vmem:[#allocation2] sm:$0xff] %v272
    // Predicated region
    $region30: #{linear_block.1} parent=1 // pred_check
      _
    $region31: #{linear_block.1} parent=1 // pred_check_branch
      %277 = sbr.rel (0) target = $region33
    $region32: #{linear_block.1} parent=1 // pred_region
      %279 = vsyncadd [#allocation3], 0
      %s281 = sshll.u32 [#allocation2], 4
      %s282 = int_to_ptr.vmem [resolvable:$true] %s281
      %s283 = sshll.u32 %s7, 4
      %s284 = int_to_ptr.hbm [resolvable:$true] %s283
      %286 = dma.vmem_to_hbm [thread:$0]  %s282, 128, %s284, [#allocation3]
    $region33: #{linear_block.1} parent=1 // pred_fallthru
      _
    // Predicated region
    $region34: #{linear_block.1} parent=1 // pred_check
      _
    $region35: #{linear_block.1} parent=1 // pred_check_branch
      %288 = sbr.rel (0) target = $region37
    $region36: #{linear_block.1} parent=1 // pred_region
      %290 = dma.done [#allocation3], 128
    $region37: #{linear_block.1} parent=1 // pred_fallthru
      _
    %291 = vsyncpa [#allocation3], 1

</llo_original>
